<compile_context>
chip_gen: v7x
topology: tpu7x:2x2x1
jax: 0.10.0
libtpu: 0.0.40
codegen_flags: <defaults>
</compile_context>

<pallas_src>
import functools

import jax
import jax.numpy as jnp
from jax.experimental import pallas as pl
from jax.experimental.pallas import tpu as pltpu

_LANES = 128  # lane-dense padded width; padding >= 2K-2 keeps rolled lanes harmless


def _wavelet_loss_kernel(x_ref, out_ref, stack_ref, *, K, sqrt2):
    """x_ref: (2, L) f32 -- row 0 = hi (zero-padded), row 1 = lo (zero-padded)."""
    L = x_ref.shape[1]
    nsh = K // 2                      # shifts 0, 2, ..., K-2
    hi = x_ref[0:1, :]                # (1, L)
    lo = x_ref[1:2, :]                # (1, L)

    # Rows 0/1: raw filters (their lane-sums give hi.sum() and lo.sum()).
    stack_ref[0:1, :] = hi
    stack_ref[1:2, :] = lo

    # Rows 2+3m .. 4+3m: products whose lane-sums are the shifted correlations
    #   corr(w1, w2, s) = sum_i w1[i] * w2[i + s]
    # (zero padding makes every i with i + s >= K contribute 0; roll wrap-around
    #  lands in the zero region of the un-rolled operand, so it contributes 0 too).
    for m in range(nsh):
        s = 2 * m
        if s == 0:
            hi_s, lo_s = hi, lo
        else:
            # left-shift by s lanes == roll by (L - s):  w_s[i] = w[i + s]
            hi_s = pltpu.roll(hi, shift=L - s, axis=1)
            lo_s = pltpu.roll(lo, shift=L - s, axis=1)
        r = 2 + 3 * m
        stack_ref[r + 0:r + 1, :] = hi * hi_s     # corr(hi, hi, s)
        stack_ref[r + 1:r + 2, :] = lo * lo_s     # corr(lo, lo, s)
        stack_ref[r + 2:r + 3, :] = lo * hi_s     # corr(lo, hi, s)

    # One lane reduction produces every correlation / sum at once.
    c = jnp.sum(stack_ref[...], axis=1, keepdims=True)        # (R, 1)

    # Per-row targets: row0 (hi.sum) -> 0, row1 (lo.sum) -> sqrt(2),
    # rows 2,3 (zero-shift self terms) -> 1, everything else -> 0.
    R = 2 + 3 * nsh
    ridx = jax.lax.broadcasted_iota(jnp.int32, (R, 1), 0)
    tgt = jnp.where(ridx == 1, jnp.float32(sqrt2),
                    jnp.where((ridx == 2) | (ridx == 3),
                              jnp.float32(1.0), jnp.float32(0.0)))

    # loss = sum over rows of (c - target)^2
    out_ref[...] = jnp.sum((c - tgt) ** 2, keepdims=True).astype(out_ref.dtype)


@jax.jit
def wavelet_loss(hi, lo):
    """hi, lo: (1, 1, K) filters in torch conv1d weight layout. Returns (1,) f32."""
    K = hi.shape[-1]
    if K % 2 != 0:   # formulation assumes even-length filters (see module's K//2 loops)
        raise ValueError("wavelet filter length must be even")
    if 2 * K - 2 > _LANES:
        raise ValueError("filter too long for single-vreg padded layout")

    # Pack both filters into one zero-padded lane-dense slab -> single input DMA.
    filt = jnp.concatenate(
        [hi.reshape(1, K), lo.reshape(1, K)], axis=0).astype(jnp.float32)   # (2, K)
    x = jnp.zeros((2, _LANES), jnp.float32).at[:, :K].set(filt)

    R = 2 + 3 * (K // 2)
    out = pl.pallas_call(
        functools.partial(_wavelet_loss_kernel, K=K, sqrt2=2.0 ** 0.5),
        out_shape=jax.ShapeDtypeStruct((1, 1), jnp.float32),
        in_specs=[pl.BlockSpec(memory_space=pltpu.MemorySpace.VMEM)],
        out_specs=pl.BlockSpec(memory_space=pltpu.MemorySpace.VMEM),
        scratch_shapes=[pltpu.VMEM((R, _LANES), jnp.float32)],
    )(x)
    return out.reshape(1)  # match PyTorch output shape (1,)


def _reference_loss(hi, lo):
    """Pure-JAX reference mirroring the PyTorch module exactly."""
    h = hi.reshape(-1).astype(jnp.float32)
    l = lo.reshape(-1).astype(jnp.float32)
    K = h.shape[0]

    def self_o(w):
        r = (jnp.sum(w * w) - 1.0) ** 2
        for m in range(1, K // 2):
            r = r + jnp.sum(w[: K - 2 * m] * w[2 * m:]) ** 2
        return r

    def cross_o(w1, w2):
        r = jnp.float32(0.0)
        for m in range(0, K // 2):
            r = r + jnp.sum(w1[: K - 2 * m] * w2[2 * m:]) ** 2
        return r

    return (self_o(h) + self_o(l) + jnp.sum(h) ** 2
            + (jnp.sum(l) - 2.0 ** 0.5) ** 2 + cross_o(l, h)).reshape(1)


if __name__ == "__main__":
    # Deterministic synthetic wavelet filters: (out_ch=1, in_ch=1, K=8),
    # same layout as the nn.Conv1d weights used by the wavelet module.
    K = 8
    key = jax.random.PRNGKey(0)
    k_hi, k_lo = jax.random.split(key)
    hi = jax.random.normal(k_hi, (1, 1, K), dtype=jnp.float32) * 0.3
    lo = jax.random.normal(k_lo, (1, 1, K), dtype=jnp.float32) * 0.3

    out = jax.block_until_ready(wavelet_loss(hi, lo))
    ref = _reference_loss(hi, lo)

    assert out.shape == (1,)
    assert jnp.allclose(out, ref, rtol=1e-5, atol=1e-5), (out, ref)

    print("KERNEL_OK")
</pallas_src>

<mosaic_0001>
module attributes {stable_mosaic.version = 11 : i64} {
  func.func @_wavelet_loss_kernel(%arg0: memref<2x128xf32, #tpu.memory_space<vmem>>, %arg1: memref<1x1xf32, #tpu.memory_space<vmem>>, %arg2: memref<14x128xf32, #tpu.memory_space<vmem>>) attributes {dimension_semantics = [], scalar_prefetch = 0 : i64, scratch_operands = 1 : i64, tpu.core_type = #tpu.core_type<tc>} {
    %c0 = arith.constant 0 : index
    %c0_0 = arith.constant 0 : index
    %0 = vector.load %arg0[%c0, %c0_0] : memref<2x128xf32, #tpu.memory_space<vmem>>, vector<1x128xf32>
    %c1 = arith.constant 1 : index
    %c0_1 = arith.constant 0 : index
    %1 = vector.load %arg0[%c1, %c0_1] : memref<2x128xf32, #tpu.memory_space<vmem>>, vector<1x128xf32>
    %c0_2 = arith.constant 0 : index
    %c0_3 = arith.constant 0 : index
    %2 = vector.load %arg2[%c0_2, %c0_3] : memref<14x128xf32, #tpu.memory_space<vmem>>, vector<1x128xf32>
    tpu.vector_store %arg2[%c0_2, %c0_3], %0 {strides = array<i32>} : memref<14x128xf32, #tpu.memory_space<vmem>>, vector<1x128xf32>,
    %c1_4 = arith.constant 1 : index
    %c0_5 = arith.constant 0 : index
    %3 = vector.load %arg2[%c1_4, %c0_5] : memref<14x128xf32, #tpu.memory_space<vmem>>, vector<1x128xf32>
    tpu.vector_store %arg2[%c1_4, %c0_5], %1 {strides = array<i32>} : memref<14x128xf32, #tpu.memory_space<vmem>>, vector<1x128xf32>,
    %4 = arith.mulf %0, %0 : vector<1x128xf32>
    %c2 = arith.constant 2 : index
    %c0_6 = arith.constant 0 : index
    %5 = vector.load %arg2[%c2, %c0_6] : memref<14x128xf32, #tpu.memory_space<vmem>>, vector<1x128xf32>
    tpu.vector_store %arg2[%c2, %c0_6], %4 {strides = array<i32>} : memref<14x128xf32, #tpu.memory_space<vmem>>, vector<1x128xf32>,
    %6 = arith.mulf %1, %1 : vector<1x128xf32>
    %c3 = arith.constant 3 : index
    %c0_7 = arith.constant 0 : index
    %7 = vector.load %arg2[%c3, %c0_7] : memref<14x128xf32, #tpu.memory_space<vmem>>, vector<1x128xf32>
    tpu.vector_store %arg2[%c3, %c0_7], %6 {strides = array<i32>} : memref<14x128xf32, #tpu.memory_space<vmem>>, vector<1x128xf32>,
    %8 = arith.mulf %1, %0 : vector<1x128xf32>
    %c4 = arith.constant 4 : index
    %c0_8 = arith.constant 0 : index
    %9 = vector.load %arg2[%c4, %c0_8] : memref<14x128xf32, #tpu.memory_space<vmem>>, vector<1x128xf32>
    tpu.vector_store %arg2[%c4, %c0_8], %8 {strides = array<i32>} : memref<14x128xf32, #tpu.memory_space<vmem>>, vector<1x128xf32>,
    %c126_i32 = arith.constant 126 : i32
    %10 = tpu.dynamic_rotate %0 by %c126_i32 dim 1 : vector<1x128xf32>, i32 -> vector<1x128xf32>
    %c126_i32_9 = arith.constant 126 : i32
    %11 = tpu.dynamic_rotate %1 by %c126_i32_9 dim 1 : vector<1x128xf32>, i32 -> vector<1x128xf32>
    %12 = arith.mulf %0, %10 : vector<1x128xf32>
    %c5 = arith.constant 5 : index
    %c0_10 = arith.constant 0 : index
    %13 = vector.load %arg2[%c5, %c0_10] : memref<14x128xf32, #tpu.memory_space<vmem>>, vector<1x128xf32>
    tpu.vector_store %arg2[%c5, %c0_10], %12 {strides = array<i32>} : memref<14x128xf32, #tpu.memory_space<vmem>>, vector<1x128xf32>,
    %14 = arith.mulf %1, %11 : vector<1x128xf32>
    %c6 = arith.constant 6 : index
    %c0_11 = arith.constant 0 : index
    %15 = vector.load %arg2[%c6, %c0_11] : memref<14x128xf32, #tpu.memory_space<vmem>>, vector<1x128xf32>
    tpu.vector_store %arg2[%c6, %c0_11], %14 {strides = array<i32>} : memref<14x128xf32, #tpu.memory_space<vmem>>, vector<1x128xf32>,
    %16 = arith.mulf %1, %10 : vector<1x128xf32>
    %c7 = arith.constant 7 : index
    %c0_12 = arith.constant 0 : index
    %17 = vector.load %arg2[%c7, %c0_12] : memref<14x128xf32, #tpu.memory_space<vmem>>, vector<1x128xf32>
    tpu.vector_store %arg2[%c7, %c0_12], %16 {strides = array<i32>} : memref<14x128xf32, #tpu.memory_space<vmem>>, vector<1x128xf32>,
    %c124_i32 = arith.constant 124 : i32
    %18 = tpu.dynamic_rotate %0 by %c124_i32 dim 1 : vector<1x128xf32>, i32 -> vector<1x128xf32>
    %c124_i32_13 = arith.constant 124 : i32
    %19 = tpu.dynamic_rotate %1 by %c124_i32_13 dim 1 : vector<1x128xf32>, i32 -> vector<1x128xf32>
    %20 = arith.mulf %0, %18 : vector<1x128xf32>
    %c8 = arith.constant 8 : index
    %c0_14 = arith.constant 0 : index
    %21 = vector.load %arg2[%c8, %c0_14] : memref<14x128xf32, #tpu.memory_space<vmem>>, vector<1x128xf32>
    tpu.vector_store %arg2[%c8, %c0_14], %20 {strides = array<i32>} : memref<14x128xf32, #tpu.memory_space<vmem>>, vector<1x128xf32>,
    %22 = arith.mulf %1, %19 : vector<1x128xf32>
    %c9 = arith.constant 9 : index
    %c0_15 = arith.constant 0 : index
    %23 = vector.load %arg2[%c9, %c0_15] : memref<14x128xf32, #tpu.memory_space<vmem>>, vector<1x128xf32>
    tpu.vector_store %arg2[%c9, %c0_15], %22 {strides = array<i32>} : memref<14x128xf32, #tpu.memory_space<vmem>>, vector<1x128xf32>,
    %24 = arith.mulf %1, %18 : vector<1x128xf32>
    %c10 = arith.constant 10 : index
    %c0_16 = arith.constant 0 : index
    %25 = vector.load %arg2[%c10, %c0_16] : memref<14x128xf32, #tpu.memory_space<vmem>>, vector<1x128xf32>
    tpu.vector_store %arg2[%c10, %c0_16], %24 {strides = array<i32>} : memref<14x128xf32, #tpu.memory_space<vmem>>, vector<1x128xf32>,
    %c122_i32 = arith.constant 122 : i32
    %26 = tpu.dynamic_rotate %0 by %c122_i32 dim 1 : vector<1x128xf32>, i32 -> vector<1x128xf32>
    %c122_i32_17 = arith.constant 122 : i32
    %27 = tpu.dynamic_rotate %1 by %c122_i32_17 dim 1 : vector<1x128xf32>, i32 -> vector<1x128xf32>
    %28 = arith.mulf %0, %26 : vector<1x128xf32>
    %c11 = arith.constant 11 : index
    %c0_18 = arith.constant 0 : index
    %29 = vector.load %arg2[%c11, %c0_18] : memref<14x128xf32, #tpu.memory_space<vmem>>, vector<1x128xf32>
    tpu.vector_store %arg2[%c11, %c0_18], %28 {strides = array<i32>} : memref<14x128xf32, #tpu.memory_space<vmem>>, vector<1x128xf32>,
    %30 = arith.mulf %1, %27 : vector<1x128xf32>
    %c12 = arith.constant 12 : index
    %c0_19 = arith.constant 0 : index
    %31 = vector.load %arg2[%c12, %c0_19] : memref<14x128xf32, #tpu.memory_space<vmem>>, vector<1x128xf32>
    tpu.vector_store %arg2[%c12, %c0_19], %30 {strides = array<i32>} : memref<14x128xf32, #tpu.memory_space<vmem>>, vector<1x128xf32>,
    %32 = arith.mulf %1, %26 : vector<1x128xf32>
    %c13 = arith.constant 13 : index
    %c0_20 = arith.constant 0 : index
    %33 = vector.load %arg2[%c13, %c0_20] : memref<14x128xf32, #tpu.memory_space<vmem>>, vector<1x128xf32>
    tpu.vector_store %arg2[%c13, %c0_20], %32 {strides = array<i32>} : memref<14x128xf32, #tpu.memory_space<vmem>>, vector<1x128xf32>,
    %c0_21 = arith.constant 0 : index
    %c0_22 = arith.constant 0 : index
    %34 = vector.load %arg2[%c0_21, %c0_22] : memref<14x128xf32, #tpu.memory_space<vmem>>, vector<14x128xf32>
    %cst = arith.constant dense<0.000000e+00> : vector<14xf32>
    %35 = vector.multi_reduction <add>, %34, %cst [1] : vector<14x128xf32> to vector<14xf32>
    %36 = vector.shape_cast %35 : vector<14xf32> to vector<14x1xf32>
    %37 = tpu.iota {dimensions = array<i32: 0>} : vector<14x1xi32>
    %c1_i32 = arith.constant 1 : i32
    %38 = vector.broadcast %c1_i32 : i32 to vector<14x1xi32>
    %39 = arith.cmpi eq, %37, %38 : vector<14x1xi32>
    %c2_i32 = arith.constant 2 : i32
    %40 = vector.broadcast %c2_i32 : i32 to vector<14x1xi32>
    %41 = arith.cmpi eq, %37, %40 : vector<14x1xi32>
    %c3_i32 = arith.constant 3 : i32
    %42 = vector.broadcast %c3_i32 : i32 to vector<14x1xi32>
    %43 = arith.cmpi eq, %37, %42 : vector<14x1xi32>
    %44 = arith.ori %41, %43 : vector<14x1xi1>
    %cst_23 = arith.constant 1.000000e+00 : f32
    %cst_24 = arith.constant 0.000000e+00 : f32
    %45 = vector.broadcast %cst_23 : f32 to vector<14x1xf32>
    %46 = vector.broadcast %cst_24 : f32 to vector<14x1xf32>
    %47 = arith.select %44, %45, %46 : vector<14x1xi1>, vector<14x1xf32>
    %cst_25 = arith.constant 1.41421354 : f32
    %48 = vector.broadcast %cst_25 : f32 to vector<14x1xf32>
    %49 = arith.select %39, %48, %47 : vector<14x1xi1>, vector<14x1xf32>
    %50 = arith.subf %36, %49 : vector<14x1xf32>
    %51 = arith.mulf %50, %50 : vector<14x1xf32>
    %52 = vector.shape_cast %51 : vector<14x1xf32> to vector<1x14x1xf32>
    %cst_26 = arith.constant dense<0.000000e+00> : vector<1xf32>
    %53 = vector.multi_reduction <add>, %52, %cst_26 [1, 2] : vector<1x14x1xf32> to vector<1xf32>
    %54 = vector.shape_cast %53 : vector<1xf32> to vector<1x1x1xf32>
    %55 = vector.extract %54[0, 0, 0] : f32 from vector<1x1x1xf32>
    %56 = vector.broadcast %55 : f32 to vector<1x1xf32>
    %c0_27 = arith.constant 0 : index
    %c0_28 = arith.constant 0 : index
    %57 = vector.load %arg1[%c0_27, %c0_28] : memref<1x1xf32, #tpu.memory_space<vmem>>, vector<1x1xf32>
    tpu.vector_store %arg1[%c0_27, %c0_28], %56 {strides = array<i32>} : memref<1x1xf32, #tpu.memory_space<vmem>>, vector<1x1xf32>,
    return
  }
}

</mosaic_0001>

<llo_original>
// kernel: wavelet_loss.1
$region0: #{wavelet_loss.1}
  #allocation0 [shape = 'u32[]', space=smem, size = 0x4, offset = 0x4, fixed_abs, tag = 'smem constant byte address 0x4 - core index']
  #allocation1 [shape = 'u32[144,128]{1,0:T(1,128)}', space=vmem, size = 0x12000, scoped, tag = 'internal scratch']
  #allocation2 [shape = 'f32[14,128]{1,0:T(8,128)}', space=vmem, size = 0x2000, scoped, tag = 'scratch operand']
  %s0 = inlined_call_operand.vmem [shape: f32[2,128], index: 0, kind: input, shape index: {}]
  %s1 = inlined_call_operand.hbm [shape: f32[1,1], index: 1, kind: output, shape index: {}]
  %s2 = sld [smem:[#allocation0]]
  $region14: #{wavelet_loss.1} parent=0
    _
  %s4 = ssub.s32 1, %s2
  %s5 = scalar_select 0, %s4, %s2
  $region1: #{wavelet_loss.1} parent=0
    #allocation3 [shape = 'u8[512]{0}', space=vmem, size = 0x400, scoped, tag = 'output window, operand 0, single buffered']
    #allocation4 [shape = 's32[1]{0}', space=sflag, size = 0x4, scoped, tag = 'scoped memory for wavelet_loss.1']
    %6 = vsyncpa [#allocation4], 0
    // Predicated region
    $region2: #{wavelet_loss.1} parent=1 // pred_check
      _
    $region3: #{wavelet_loss.1} parent=1 // pred_check_branch
      %8 = sbr.rel (0) target = $region5
    $region4: #{wavelet_loss.1} parent=1 // pred_region
      _
    $region5: #{wavelet_loss.1} parent=1 // pred_fallthru
      _
    %v9 = vld [vmem:[%s0] sm:$0x1]
    %v10 = vld [vmem:[%s0 + $0x1] sm:$0x1]
    %11 = vst [vmem:[#allocation2] sm:$0x1] %v9
    %12 = vst [vmem:[#allocation2 + $0x1] sm:$0x1] %v10
    %v13 = vmul.f32 %v9, %v9
    %14 = vst [vmem:[#allocation2 + $0x2] sm:$0x1] %v13
    %v15 = vmul.f32 %v10, %v10
    %16 = vst [vmem:[#allocation2 + $0x3] sm:$0x1] %v15
    %v17 = vmul.f32 %v10, %v9
    %18 = vst [vmem:[#allocation2 + $0x4] sm:$0x1] %v17
    %19 = vrot.lane.b32.xlu0 %v9, 126
    %v20 = vpop.permute.xlu0 %19
    %21 = vrot.lane.b32.xlu0 %v10, 126
    %v22 = vpop.permute.xlu0 %21
    %v23 = vmul.f32 %v9, %v20
    %24 = vst [vmem:[#allocation2 + $0x5] sm:$0x1] %v23
    %v25 = vmul.f32 %v10, %v22
    %26 = vst [vmem:[#allocation2 + $0x6] sm:$0x1] %v25
    %v27 = vmul.f32 %v10, %v20
    %28 = vst [vmem:[#allocation2 + $0x7] sm:$0x1] %v27
    %29 = vrot.lane.b32.xlu0 %v9, 124
    %v30 = vpop.permute.xlu0 %29
    %31 = vrot.lane.b32.xlu0 %v10, 124
    %v32 = vpop.permute.xlu0 %31
    %v33 = vmul.f32 %v9, %v30
    %34 = vst [vmem:[#allocation2 + $0x8] sm:$0x1] %v33
    %v35 = vmul.f32 %v10, %v32
    %36 = vst [vmem:[#allocation2 + $0x9] sm:$0x1] %v35
    %v37 = vmul.f32 %v10, %v30
    %38 = vst [vmem:[#allocation2 + $0xa] sm:$0x1] %v37
    %39 = vrot.lane.b32.xlu0 %v9, 122
    %v40 = vpop.permute.xlu0 %39
    %41 = vrot.lane.b32.xlu0 %v10, 122
    %v42 = vpop.permute.xlu0 %41
    %v43 = vmul.f32 %v9, %v40
    %44 = vst [vmem:[#allocation2 + $0xb] sm:$0x1] %v43
    %v45 = vmul.f32 %v10, %v42
    %46 = vst [vmem:[#allocation2 + $0xc] sm:$0x1] %v45
    %v47 = vmul.f32 %v10, %v40
    %48 = vst [vmem:[#allocation2 + $0xd] sm:$0x1] %v47
    %v49 = vld [vmem:[#allocation2] sm:$0xff]
    %v50 = vld [vmem:[#allocation2 + $0x8] sm:$0x3f]
    %51 = vadd.xlane.f32.xlu0 %v49
    %v52 = vpop.xlane.xlu0 %51
    %vm53 = vcmask 1045504
    %v54 = vsel %vm53, %v50, 0.0
    %55 = vadd.xlane.f32.xlu0 %v54
    %v56 = vpop.xlane.xlu0 %55
    %v57 = vlaneseq
    %v58 = vshrl.u32 %v57, 7
    %v59 = vadd.s32 %v58, 8
    %vm60 = vcmp.eq.s32.totalorder %v58, 1
    %vm61 = vcmp.eq.s32.totalorder %v59, 1
    %vm62 = vcmp.eq.s32.totalorder %v58, 2
    %vm63 = vcmp.eq.s32.totalorder %v59, 2
    %vm64 = vcmp.eq.s32.totalorder %v58, 3
    %vm65 = vcmp.eq.s32.totalorder %v59, 3
    %vm66 = vmor %vm62, %vm64
    %vm67 = vmor %vm63, %vm65
    %v68 = vsel %vm66, 1.0, 0.0
    %v69 = vsel %vm67, 1.0, 0.0
    %v70 = vsel %vm60, 1.4142135, %v68
    %v71 = vsel %vm61, 1.4142135, %v69
    %v72 = vsub.f32 %v52, %v70
    %v73 = vsub.f32 %v56, %v71
    %v74 = vmul.f32 %v72, %v72
    %v75 = vmul.f32 %v73, %v73
    %vm76 = vcmask 7168
    %v77 = vsel %vm76, %v74, 0.0
    %vm78 = vcmask 5120
    %v79 = vsel %vm78, %v75, 0.0
    %v80 = vadd.f32 %v77, %v79
    %81 = vadd.xlane.f32.xlu0 %v80
    %v82 = vpop.xlane.xlu0 %81
    %v83 = vrot.slane %v82, 4
    %v84 = vadd.f32 %v82, %v83
    %v85 = vrot.slane %v84, 2
    %v86 = vadd.f32 %v84, %v85
    %v87 = vrot.slane %v86, 1
    %v88 = vadd.f32 %v86, %v87
    %s89 = vtos %v88
    %v90 = vstv %s89
    %vm91 = vcmask 0
    %92 = vst.msk [vmem:[#allocation3] sm:$0x1] %vm91, %v90
    // Predicated region
    $region6: #{wavelet_loss.1} parent=1 // pred_check
      _
    $region7: #{wavelet_loss.1} parent=1 // pred_check_branch
      %94 = sbr.rel (0) target = $region9
    $region8: #{wavelet_loss.1} parent=1 // pred_region
      %s96 = ssub.s32 16, 16
      %97 = vsyncadd [#allocation4], %s96
      %s99 = sshll.u32 [#allocation3], 4
      %s100 = int_to_ptr.vmem [resolvable:$true] %s99
      %102 = dma.vmem_to_hbm [thread:$0]  %s100, 16, %s1, [#allocation4]
    $region9: #{wavelet_loss.1} parent=1 // pred_fallthru
      _
    // Predicated region
    $region10: #{wavelet_loss.1} parent=1 // pred_check
      _
    $region11: #{wavelet_loss.1} parent=1 // pred_check_branch
      %104 = sbr.rel (0) target = $region13
    $region12: #{wavelet_loss.1} parent=1 // pred_region
      %105 = dma.done [#allocation4], 16
    $region13: #{wavelet_loss.1} parent=1 // pred_fallthru
      _
    %106 = vsyncpa [#allocation4], 1

</llo_original>
